<compile_context>
chip_gen: v5e
topology: v5e:2x2
jax: 0.10.0
libtpu: 0.0.40
codegen_flags: <defaults>
</compile_context>

<pallas_src>
import numpy as np
import jax
import jax.numpy as jnp
from jax.experimental import pallas as pl
from jax.experimental.pallas import tpu as pltpu

KH = KW = 3
PAD = 1
LEAKY_SLOPE = 0.1
BN_EPS = 1e-5
VMEM_LIMIT = 32 * 1024 * 1024   # safe on v7x (64 MiB physical per TC)


def conv_stats_kernel(p_ref, w_ref, ssum_ref, ssq_ref):
    # p_ref   : (K, TILE_M)    bf16  im2col patch tile (M on lanes)
    # w_ref   : (Co8, K)       bf16  full weight, resident across the grid
    # ssum_ref: (1, Co8, 1)    f32   per-tile channel sums        (for BatchNorm)
    # ssq_ref : (1, Co8, 1)    f32   per-tile channel sum-squares (for BatchNorm)
    acc = jnp.dot(w_ref[...], p_ref[...], preferred_element_type=jnp.float32)  # (Co8, TILE_M)
    ssum_ref[0] = jnp.sum(acc, axis=1, keepdims=True)
    ssq_ref[0] = jnp.sum(acc * acc, axis=1, keepdims=True)


def conv_bn_lrelu_kernel(p_ref, w_ref, scale_ref, shift_ref, o_ref):
    # Recompute the conv tile, then fused BatchNorm (pre-folded scale/shift) + LeakyReLU(0.1).
    # scale/shift: (Co8, 1) f32, broadcast along the lane (M) axis.
    acc = jnp.dot(w_ref[...], p_ref[...], preferred_element_type=jnp.float32)  # (Co8, TILE_M)
    z = acc * scale_ref[...] + shift_ref[...]
    o_ref[...] = jnp.where(z >= 0, z, LEAKY_SLOPE * z).astype(o_ref.dtype)


def make_hamilton_weight(r, i, j, k):
    """Real (Cout, Cin, KH, KW) weight implementing quaternion convolution."""
    row_r = jnp.concatenate([r, -i, -j, -k], axis=1)
    row_i = jnp.concatenate([i,  r, -k,  j], axis=1)
    row_j = jnp.concatenate([j,  k,  r, -i], axis=1)
    row_k = jnp.concatenate([k, -j,  i,  r], axis=1)
    return jnp.concatenate([row_r, row_i, row_j, row_k], axis=0)


def _pick_tile_m(M):
    # Big tiles amortize the ~0.35us per-grid-step overhead; cap so the "parallel" grid axis
    # keeps >= 2 tiles (v7x megacore).  Must be a multiple of 128 (lane-dense blocks).
    if M < 2 * 128:
        return 128
    return int(min(1024, 128 * (M // 256)))


def cnn_block_forward(x_nchw, w_oihw, gamma, beta):
    N, Cin, H, W = x_nchw.shape
    Cout = w_oihw.shape[0]
    M = N * H * W
    K = Cin * KH * KW
    Co8 = 8 * pl.cdiv(Cout, 8)                 # sublane-pad the channel axis (cheap: <= 8x-... tiny)
    TILE_M = _pick_tile_m(M)
    Mp = TILE_M * pl.cdiv(M, TILE_M)
    n_tiles = Mp // TILE_M

    # Channel-major padded input, im2col in transposed (K, M) layout so output channels land on
    # sublanes and the long M axis is lane-dense.  k ordering is (cin, kh, kw), which matches a
    # plain reshape of the OIHW weight.
    xT = jnp.transpose(x_nchw, (1, 0, 2, 3)).astype(jnp.float32)        # (Cin, N, H, W)
    xT_pad = jnp.pad(xT, ((0, 0), (0, 0), (PAD, PAD), (PAD, PAD)))
    taps = [xT_pad[:, :, kh:kh + H, kw:kw + W] for kh in range(KH) for kw in range(KW)]
    patches_t = jnp.stack(taps, axis=1).reshape(K, M)                   # (K, M)
    # Zero column-padding keeps the BN sums exact (zero columns -> zero conv columns -> add 0).
    patches_t = jnp.pad(patches_t, ((0, 0), (0, Mp - M))).astype(jnp.bfloat16)

    # Weight (Cout, Cin, KH, KW) -> (Co8, K) bf16 MXU operand; row order matches patch k order.
    w_t = w_oihw.astype(jnp.float32).reshape(Cout, K)
    w_t = jnp.pad(w_t, ((0, Co8 - Cout), (0, 0))).astype(jnp.bfloat16)

    params = pltpu.CompilerParams(
        dimension_semantics=("parallel",),
        vmem_limit_bytes=VMEM_LIMIT,
    )

    # ---- Pass 1: stats-only (single K contraction per tile, emit per-tile BN partial sums).
    ssum, ssq = pl.pallas_call(
        conv_stats_kernel,
        out_shape=(
            jax.ShapeDtypeStruct((n_tiles, Co8, 1), jnp.float32),
            jax.ShapeDtypeStruct((n_tiles, Co8, 1), jnp.float32),
        ),
        grid_spec=pltpu.PrefetchScalarGridSpec(
            num_scalar_prefetch=0,
            grid=(n_tiles,),
            in_specs=[
                pl.BlockSpec((K, TILE_M), lambda i: (0, i)),
                pl.BlockSpec((Co8, K), lambda i: (0, 0)),
            ],
            out_specs=[
                pl.BlockSpec((1, Co8, 1), lambda i: (i, 0, 0)),
                pl.BlockSpec((1, Co8, 1), lambda i: (i, 0, 0)),
            ],
        ),
        compiler_params=params,
    )(patches_t, w_t)

    # ---- Tiny O(Cout) finalize in JAX: exact biased batch stats, pre-fold BN into scale/shift.
    sum_c = jnp.sum(ssum[:, :, 0], axis=0)                  # (Co8,)
    sumsq_c = jnp.sum(ssq[:, :, 0], axis=0)
    mean = sum_c / M
    var = jnp.maximum(sumsq_c / M - mean * mean, 0.0)       # biased (train-mode) variance, f32
    inv_std = jax.lax.rsqrt(var + BN_EPS)
    gamma_p = jnp.pad(gamma.astype(jnp.float32), (0, Co8 - Cout))
    beta_p = jnp.pad(beta.astype(jnp.float32), (0, Co8 - Cout))
    scale = (gamma_p * inv_std).reshape(Co8, 1)
    shift = (beta_p - mean * gamma_p * inv_std).reshape(Co8, 1)

    # ---- Pass 2: recompute conv tile, fused normalize + LeakyReLU, single lane-dense store.
    out_t = pl.pallas_call(
        conv_bn_lrelu_kernel,
        out_shape=jax.ShapeDtypeStruct((Co8, Mp), jnp.float32),
        grid_spec=pltpu.PrefetchScalarGridSpec(
            num_scalar_prefetch=0,
            grid=(n_tiles,),
            in_specs=[
                pl.BlockSpec((K, TILE_M), lambda i: (0, i)),
                pl.BlockSpec((Co8, K), lambda i: (0, 0)),
                pl.BlockSpec((Co8, 1), lambda i: (0, 0)),
                pl.BlockSpec((Co8, 1), lambda i: (0, 0)),
            ],
            out_specs=pl.BlockSpec((Co8, TILE_M), lambda i: (0, i)),
        ),
        compiler_params=params,
    )(patches_t, w_t, scale, shift)

    out = out_t[:Cout, :M].reshape(Cout, N, H, W)
    return jnp.transpose(out, (1, 0, 2, 3))  # back to NCHW


def reference_forward(x_nchw, w_oihw, gamma, beta):
    """Pure-JAX reference. Conv operands are quantized to bf16 exactly as the kernel's MXU
    operands are, so the check isolates kernel-structure errors; all math is f32."""
    xq = x_nchw.astype(jnp.bfloat16).astype(jnp.float32)
    wq = w_oihw.astype(jnp.bfloat16).astype(jnp.float32)
    y = jax.lax.conv_general_dilated(
        xq, wq, window_strides=(1, 1),
        padding=((PAD, PAD), (PAD, PAD)),
        dimension_numbers=("NCHW", "OIHW", "NCHW"))
    mean = jnp.mean(y, axis=(0, 2, 3), keepdims=True)
    var = jnp.mean((y - mean) ** 2, axis=(0, 2, 3), keepdims=True)
    yn = (y - mean) * jax.lax.rsqrt(var + BN_EPS)
    yn = yn * gamma[None, :, None, None] + beta[None, :, None, None]
    return jnp.where(yn >= 0, yn, LEAKY_SLOPE * yn)


if __name__ == "__main__":
    key = jax.random.PRNGKey(0)
    kx, kr, ki, kj, kk, kg, kb = jax.random.split(key, 7)

    # Small shapes consistent with the module: in_channels=8, out_channels=16 (both /4 quaternion).
    N, Cin, Cout, H, W = 2, 8, 16, 16, 16
    Iq, Oq = Cin // 4, Cout // 4

    x = jax.random.normal(kx, (N, Cin, H, W), jnp.float32)

    wscale = 1.0 / np.sqrt(4 * Iq * KH * KW)
    r = wscale * jax.random.normal(kr, (Oq, Iq, KH, KW), jnp.float32)
    i = wscale * jax.random.normal(ki, (Oq, Iq, KH, KW), jnp.float32)
    j = wscale * jax.random.normal(kj, (Oq, Iq, KH, KW), jnp.float32)
    k = wscale * jax.random.normal(kk, (Oq, Iq, KH, KW), jnp.float32)
    w = make_hamilton_weight(r, i, j, k)  # (Cout, Cin, KH, KW)

    gamma = 1.0 + 0.1 * jax.random.normal(kg, (Cout,), jnp.float32)
    beta = 0.1 * jax.random.normal(kb, (Cout,), jnp.float32)

    out = jax.block_until_ready(cnn_block_forward(x, w, gamma, beta))
    ref = jax.block_until_ready(reference_forward(x, w, gamma, beta))
    np.testing.assert_allclose(np.asarray(out), np.asarray(ref), atol=5e-3, rtol=5e-3)

    print("KERNEL_OK")
</pallas_src>

<mosaic_0001>
module attributes {stable_mosaic.version = 11 : i64} {
  func.func @conv_stats_kernel(%arg0: i32, %arg1: memref<72x256xbf16, #tpu.memory_space<vmem>>, %arg2: memref<16x72xbf16, #tpu.memory_space<vmem>>, %arg3: memref<1x16x1xf32, #tpu.memory_space<vmem>>, %arg4: memref<1x16x1xf32, #tpu.memory_space<vmem>>) attributes {dimension_semantics = [#tpu.dimension_semantics<parallel>], iteration_bounds = array<i64: 2>, scalar_prefetch = 0 : i64, scratch_operands = 0 : i64, tpu.core_type = #tpu.core_type<tc>, window_params = [{transform_indices = @transform_0, window_bounds = array<i64: 72, 256>}, {pipeline_mode = #tpu.pipeline_mode<synchronous>, transform_indices = @transform_1, window_bounds = array<i64: 16, 72>}, {transform_indices = @transform_2, window_bounds = array<i64: 1, 16, 1>}, {transform_indices = @transform_3, window_bounds = array<i64: 1, 16, 1>}]} {
    %c0 = arith.constant 0 : index
    %c0_0 = arith.constant 0 : index
    %0 = vector.load %arg2[%c0, %c0_0] : memref<16x72xbf16, #tpu.memory_space<vmem>>, vector<16x72xbf16>
    %c0_1 = arith.constant 0 : index
    %c0_2 = arith.constant 0 : index
    %1 = vector.load %arg1[%c0_1, %c0_2] : memref<72x256xbf16, #tpu.memory_space<vmem>>, vector<72x256xbf16>
    %cst = arith.constant dense<0.000000e+00> : vector<16x256xf32>
    %2 = tpu.matmul %0, %1, %cst {dimension_numbers = #tpu.dot_dimension_numbers<[1], [0], [0], [1], [0, 0, 1, 1], [], []>} : vector<16x72xbf16>, vector<72x256xbf16>, vector<16x256xf32> -> vector<16x256xf32>
    %cst_3 = arith.constant dense<0.000000e+00> : vector<16xf32>
    %3 = vector.multi_reduction <add>, %2, %cst_3 [1] : vector<16x256xf32> to vector<16xf32>
    %4 = vector.shape_cast %3 : vector<16xf32> to vector<16x1xf32>
    %c0_4 = arith.constant 0 : index
    %c0_5 = arith.constant 0 : index
    %c0_6 = arith.constant 0 : index
    %5 = vector.load %arg3[%c0_4, %c0_5, %c0_6] : memref<1x16x1xf32, #tpu.memory_space<vmem>>, vector<1x16x1xf32>
    %6 = vector.shape_cast %5 : vector<1x16x1xf32> to vector<16x1xf32>
    %7 = vector.shape_cast %4 : vector<16x1xf32> to vector<1x16x1xf32>
    tpu.vector_store %arg3[%c0_4, %c0_5, %c0_6], %7 {strides = array<i32>} : memref<1x16x1xf32, #tpu.memory_space<vmem>>, vector<1x16x1xf32>,
    %8 = arith.mulf %2, %2 : vector<16x256xf32>
    %cst_7 = arith.constant dense<0.000000e+00> : vector<16xf32>
    %9 = vector.multi_reduction <add>, %8, %cst_7 [1] : vector<16x256xf32> to vector<16xf32>
    %10 = vector.shape_cast %9 : vector<16xf32> to vector<16x1xf32>
    %c0_8 = arith.constant 0 : index
    %c0_9 = arith.constant 0 : index
    %c0_10 = arith.constant 0 : index
    %11 = vector.load %arg4[%c0_8, %c0_9, %c0_10] : memref<1x16x1xf32, #tpu.memory_space<vmem>>, vector<1x16x1xf32>
    %12 = vector.shape_cast %11 : vector<1x16x1xf32> to vector<16x1xf32>
    %13 = vector.shape_cast %10 : vector<16x1xf32> to vector<1x16x1xf32>
    tpu.vector_store %arg4[%c0_8, %c0_9, %c0_10], %13 {strides = array<i32>} : memref<1x16x1xf32, #tpu.memory_space<vmem>>, vector<1x16x1xf32>,
    return
  }
  func.func @transform_0(%arg0: i32) -> (i32, i32) {
    %c0_i32 = arith.constant 0 : i32
    %c0_i32_0 = arith.constant 0 : i32
    return %c0_i32, %arg0 : i32, i32
  }
  func.func @transform_1(%arg0: i32) -> (i32, i32) {
    %c0_i32 = arith.constant 0 : i32
    %c0_i32_0 = arith.constant 0 : i32
    %c0_i32_1 = arith.constant 0 : i32
    return %c0_i32, %c0_i32_0 : i32, i32
  }
  func.func @transform_2(%arg0: i32) -> (i32, i32, i32) {
    %c0_i32 = arith.constant 0 : i32
    %c0_i32_0 = arith.constant 0 : i32
    %c0_i32_1 = arith.constant 0 : i32
    return %arg0, %c0_i32, %c0_i32_0 : i32, i32, i32
  }
  func.func @transform_3(%arg0: i32) -> (i32, i32, i32) {
    %c0_i32 = arith.constant 0 : i32
    %c0_i32_0 = arith.constant 0 : i32
    %c0_i32_1 = arith.constant 0 : i32
    return %arg0, %c0_i32, %c0_i32_0 : i32, i32, i32
  }
}

</mosaic_0001>

<llo_original>
// kernel: tpu_custom_call.1
$region0: #{tpu_custom_call.1}
  #allocation0 [shape = 'u32[]', space=smem, size = 0x4, offset = 0x4, fixed_abs, tag = 'smem constant byte address 0x4 - core index']
  #allocation1 [shape = 'u32[72,128]{1,0:T(1,128)}', space=vmem, size = 0x9000, scoped, tag = 'internal scratch']
  %s0 = inlined_call_operand.hbm [shape: bf16[72,512], index: 0, kind: input, shape index: {}]
  %s1 = inlined_call_operand.hbm [shape: bf16[16,72], index: 1, kind: input, shape index: {}]
  %s2 = inlined_call_operand.vmem [shape: f32[2,16,1], index: 2, kind: output, shape index: {0}]
  %s3 = inlined_call_operand.vmem [shape: f32[2,16,1], index: 3, kind: output, shape index: {1}]
  %4 = xla_tuple %s2, %s3
  %s5 = sld [smem:[#allocation0]]
  $region57: #{tpu_custom_call.1} parent=0
    _
  %s7 = ssub.s32 1, %s5
  %s8 = scalar_select 0, %s7, %s5
  $region1: #{tpu_custom_call.1} parent=0
    #allocation2 [shape = 'u8[73728]{0}', space=vmem, size = 0x12000, scoped, tag = 'input window, operand 0']
    #allocation3 [shape = 's32[2]{0}', space=sflag, size = 0x8, scoped, tag = 'scoped memory for tpu_custom_call.1']
    #allocation4 [shape = 'u8[4096]{0}', space=vmem, size = 0x1000, scoped, tag = 'input window, operand 1, single buffered']
    #allocation5 [shape = 's32[1]{0}', space=sflag, size = 0x4, scoped, tag = 'scoped memory for tpu_custom_call.1']
    %9 = vsyncpa [#allocation3], 0
    %s10 = scalar_lea.sflag [#allocation3], 1
    %11 = vsyncpa %s10, 0
    %12 = vsyncpa [#allocation5], 0
    loop: start=0, step=1, limit=4
    $region2: #{tpu_custom_call.1} parent=1 // loop_pre_header
      _
    $region3: #{tpu_custom_call.1} parent=1 // loop_header
      %s14 = sphi 0, %s18
      %p15 = scmp.ge.s32.totalorder %s14, 4
      %s24 = sphi 0, %s26
      %s27 = sphi 0, %s24
      %s28 = sphi 0, %s27
      %s44 = sphi 0, %s28
      %s48 = sphi 0, %s48
      %s50 = sphi 0, %s48
      %s51 = sphi 0, %s50
      %s65 = sphi 0, %s51
      %s71 = sphi 0, %s73
      %s74 = sphi 0, %s71
      %s75 = sphi 0, %s74
      %s91 = sphi 0, %s75
      %s97 = sphi 0, %s99
      %s100 = sphi 0, %s97
      %s101 = sphi 0, %s100
      %s117 = sphi 0, %s101
    $region4: #{tpu_custom_call.1} parent=1 // loop_header_branch
      %17 = sbr.rel (%p15) target = $region8
    $region5: #{tpu_custom_call.1} parent=1 // loop_body
      %s19 = ssub.s32 %s14, 1
      %s20 = ssub.s32 %s14, 2
      %s21 = sadd.s32 %s14, 1
      %s22 = ssub.s32 %s14, %s21
      %p23 = scmp.eq.s32.totalorder %s22, 0
      %s25 = sadd.s32 %s24, 1
      %s26 = scalar_select %p23, %s24, %s25
      %p29 = pneg %p23
      %p30 = scmp.eq.s32.totalorder %s14, 1
      %p31 = por %p29, %p30
      %p32 = scmp.ne.s32.totalorder %s24, %s27
      %p33 = scmp.eq.s32.totalorder %s14, 0
      %p34 = por %p32, %p33
      %p35 = scmp.ne.s32.totalorder %s24, %s27
      %p36 = scmp.eq.s32.totalorder %s19, 1
      %p37 = por %p35, %p36
      %p38 = scmp.ne.s32.totalorder %s27, %s28
      %p39 = scmp.eq.s32.totalorder %s19, 0
      %p40 = por %p38, %p39
      %p41 = scmp.ne.s32.totalorder %s27, %s28
      %p42 = scmp.eq.s32.totalorder %s20, 1
      %p43 = por %p41, %p42
      %p45 = scmp.ne.s32.totalorder %s28, %s44
      %p46 = scmp.eq.s32.totalorder %s20, 0
      %p47 = por %p45, %p46
      %s49 = sadd.s32 %s48, 1
      %p52 = scmp.eq.s32.totalorder %s14, 1
      %p53 = scmp.ne.s32.totalorder %s48, %s50
      %p54 = scmp.eq.s32.totalorder %s14, 0
      %p55 = por %p53, %p54
      %p56 = scmp.ne.s32.totalorder %s48, %s50
      %p57 = scmp.eq.s32.totalorder %s19, 1
      %p58 = por %p56, %p57
      %p59 = scmp.ne.s32.totalorder %s50, %s51
      %p60 = scmp.eq.s32.totalorder %s19, 0
      %p61 = por %p59, %p60
      %p62 = scmp.ne.s32.totalorder %s50, %s51
      %p63 = scmp.eq.s32.totalorder %s20, 1
      %p64 = por %p62, %p63
      %p66 = scmp.ne.s32.totalorder %s51, %s65
      %p67 = scmp.eq.s32.totalorder %s20, 0
      %p68 = por %p66, %p67
      %s69 = ssub.s32 %s14, %s21
      %p70 = scmp.eq.s32.totalorder %s69, 0
      %s72 = sadd.s32 %s71, 1
      %s73 = scalar_select %p70, %s71, %s72
      %p76 = pneg %p70
      %p77 = scmp.eq.s32.totalorder %s14, 1
      %p78 = por %p76, %p77
      %p79 = scmp.ne.s32.totalorder %s71, %s74
      %p80 = scmp.eq.s32.totalorder %s14, 0
      %p81 = por %p79, %p80
      %p82 = scmp.ne.s32.totalorder %s71, %s74
      %p83 = scmp.eq.s32.totalorder %s19, 1
      %p84 = por %p82, %p83
      %p85 = scmp.ne.s32.totalorder %s74, %s75
      %p86 = scmp.eq.s32.totalorder %s19, 0
      %p87 = por %p85, %p86
      %p88 = scmp.ne.s32.totalorder %s74, %s75
      %p89 = scmp.eq.s32.totalorder %s20, 1
      %p90 = por %p88, %p89
      %p92 = scmp.ne.s32.totalorder %s75, %s91
      %p93 = scmp.eq.s32.totalorder %s20, 0
      %p94 = por %p92, %p93
      %s95 = ssub.s32 %s14, %s21
      %p96 = scmp.eq.s32.totalorder %s95, 0
      %s98 = sadd.s32 %s97, 1
      %s99 = scalar_select %p96, %s97, %s98
      %p102 = pneg %p96
      %p103 = scmp.eq.s32.totalorder %s14, 1
      %p104 = por %p102, %p103
      %p105 = scmp.ne.s32.totalorder %s97, %s100
      %p106 = scmp.eq.s32.totalorder %s14, 0
      %p107 = por %p105, %p106
      %p108 = scmp.ne.s32.totalorder %s97, %s100
      %p109 = scmp.eq.s32.totalorder %s19, 1
      %p110 = por %p108, %p109
      %p111 = scmp.ne.s32.totalorder %s100, %s101
      %p112 = scmp.eq.s32.totalorder %s19, 0
      %p113 = por %p111, %p112
      %p114 = scmp.ne.s32.totalorder %s100, %s101
      %p115 = scmp.eq.s32.totalorder %s20, 1
      %p116 = por %p114, %p115
      %p118 = scmp.ne.s32.totalorder %s101, %s117
      %p119 = scmp.eq.s32.totalorder %s20, 0
      %p120 = por %p118, %p119
      %p121 = scmp.le.s32.totalorder 1, %s14
      %p122 = scmp.lt.s32.totalorder %s14, 3
      %p123 = pnand %p121, %p122
      %p124 = pneg %p123
      // Predicated region
      $region9: #{tpu_custom_call.1} parent=5 // pred_check
        _
      $region10: #{tpu_custom_call.1} parent=5 // pred_check_branch
        %126 = sbr.rel (%p123) target = $region12
      $region11: #{tpu_custom_call.1} parent=5 // pred_region
        %s127 = ssub.s32 %s14, 1
        // Predicated region
        $region13: #{tpu_custom_call.1} parent=11 // pred_check
          %p128 = pneg %p61
        $region14: #{tpu_custom_call.1} parent=11 // pred_check_branch
          %130 = sbr.rel (%p128) target = $region16
        $region15: #{tpu_custom_call.1} parent=11 // pred_region
          %132 = vsyncadd [#allocation5], 0
          %s133 = sshll.u32 %s1, 4
          %s134 = int_to_ptr.hbm [resolvable:$true] %s133
          %s135 = sshll.u32 [#allocation4], 4
          %s136 = int_to_ptr.vmem [resolvable:$true] %s135
          %141 = dma.hbm_to_vmem [thread:$0]  %s134, 128, %s136, [#allocation5], 64, 64, 4
        $region16: #{tpu_custom_call.1} parent=11 // pred_fallthru
          _
      $region12: #{tpu_custom_call.1} parent=5 // pred_fallthru
        _
      %p142 = scmp.lt.s32.totalorder %s14, 2
      // Predicated region
      $region17: #{tpu_custom_call.1} parent=5 // pred_check
        %p143 = pneg %p142
      $region18: #{tpu_custom_call.1} parent=5 // pred_check_branch
        %145 = sbr.rel (%p143) target = $region20
      $region19: #{tpu_custom_call.1} parent=5 // pred_region
        // Predicated region
        $region21: #{tpu_custom_call.1} parent=19 // pred_check
          %p146 = pneg %p34
        $region22: #{tpu_custom_call.1} parent=19 // pred_check_branch
          %148 = sbr.rel (%p146) target = $region24
        $region23: #{tpu_custom_call.1} parent=19 // pred_region
          %s149 = sand.u32 %s24, 1
          %s150 = scalar_lea.sflag [#allocation3], %s149
          %s151 = sand.u32 %s24, 1
          %s152 = smul.addr %s151, 72
          %s153 = scalar_lea.vmem [#allocation2], %s152
          %s154 = smul.u32 2, %s14
          %156 = vsyncadd %s150, 0
          %s157 = smul.addr %s154, 4
          %s158 = scalar_lea.hbm %s0, %s157
          %s159 = sshll.u32 %s158, 4
          %s160 = int_to_ptr.hbm [resolvable:$true] %s159
          %s161 = sshll.u32 %s153, 4
          %s162 = int_to_ptr.vmem [resolvable:$true] %s161
          %167 = dma.hbm_to_vmem [thread:$0]  %s160, 1152, %s162, %s150, 256, 128, 8
        $region24: #{tpu_custom_call.1} parent=19 // pred_fallthru
          _
      $region20: #{tpu_custom_call.1} parent=5 // pred_fallthru
        _
      %p168 = scmp.le.s32.totalorder 1, %s14
      %p169 = scmp.lt.s32.totalorder %s14, 3
      %p170 = pnand %p168, %p169
      %p171 = pneg %p170
      // Predicated region
      $region25: #{tpu_custom_call.1} parent=5 // pred_check
        _
      $region26: #{tpu_custom_call.1} parent=5 // pred_check_branch
        %173 = sbr.rel (%p170) target = $region28
      $region27: #{tpu_custom_call.1} parent=5 // pred_region
        %s174 = ssub.s32 %s14, 1
        %s175 = sand.u32 %s27, 1
        %s176 = scalar_lea.sflag [#allocation3], %s175
        %s177 = sand.u32 %s27, 1
        %s178 = smul.addr %s177, 72
        %s179 = scalar_lea.vmem [#allocation2], %s178
        // Predicated region
        $region29: #{tpu_custom_call.1} parent=27 // pred_check
          %p180 = pneg %p40
        $region30: #{tpu_custom_call.1} parent=27 // pred_check_branch
          %182 = sbr.rel (%p180) target = $region32
        $region31: #{tpu_custom_call.1} parent=27 // pred_region
          %184 = dma.done %s176, 1152
        $region32: #{tpu_custom_call.1} parent=27 // pred_fallthru
          _
        // Predicated region
        $region33: #{tpu_custom_call.1} parent=27 // pred_check
          %p185 = pneg %p61
        $region34: #{tpu_custom_call.1} parent=27 // pred_check_branch
          %187 = sbr.rel (%p185) target = $region36
        $region35: #{tpu_custom_call.1} parent=27 // pred_region
          %189 = dma.done [#allocation5], 128
        $region36: #{tpu_custom_call.1} parent=27 // pred_fallthru
          _
        %s190 = sand.u32 %s27, 1
        %s191 = scalar_lea.sflag [#allocation3], %s190
        %s192 = sand.u32 %s27, 1
        %s193 = smul.addr %s192, 72
        %s194 = scalar_lea.vmem [#allocation2], %s193
        %p195 = pneg %p40
        %p196 = pneg %p37
        %p197 = pneg %p61
        %p198 = pneg %p58
        %p199 = pneg %p87
        %p200 = pneg %p84
        %p201 = scmp.lt.s32.totalorder %s19, 1
        %s202 = scalar_select %p201, %s19, 1
        %s203 = smul.addr %s202, 2
        %s204 = smul.addr %s203, 8
        %s205 = scalar_lea.vmem %s2, %s204
        %p206 = pneg %p113
        %p207 = pneg %p110
        %p208 = scmp.lt.s32.totalorder %s19, 1
        %s209 = scalar_select %p208, %s19, 1
        %s210 = smul.addr %s209, 2
        %s211 = smul.addr %s210, 8
        %s212 = scalar_lea.vmem %s3, %s211
        %s213 = smul.u32 2, %s19
        %p214 = scmp.lt.s32.totalorder %s19, 1
        %s215 = scalar_select %p214, %s19, 1
        %s216 = smul.addr %s215, 2
        %s217 = smul.addr %s216, 8
        %s218 = scalar_lea.vmem %s2, %s217
        %p219 = scmp.lt.s32.totalorder %s19, 1
        %s220 = scalar_select %p219, %s19, 1
        %s221 = smul.addr %s220, 2
        %s222 = smul.addr %s221, 8
        %s223 = scalar_lea.vmem %s3, %s222
        %v225 = vld [vmem:[#allocation4] sm:$0xf]
        %v226 = vld [vmem:[#allocation4 + $0x4] sm:$0xf]
        %v227 = vld [vmem:[%s179] sm:$0xff]
        %v228 = vld [vmem:[%s179 + $0x8] sm:$0xff]
        %v229 = vld [vmem:[%s179 + $0x10] sm:$0xff]
        %v230 = vld [vmem:[%s179 + $0x18] sm:$0xff]
        %v231 = vld [vmem:[%s179 + $0x20] sm:$0xff]
        %v232 = vld [vmem:[%s179 + $0x28] sm:$0xff]
        %v233 = vld [vmem:[%s179 + $0x30] sm:$0xff]
        %v234 = vld [vmem:[%s179 + $0x38] sm:$0xff]
        %v235 = vld [vmem:[%s179 + $0x40] sm:$0xff]
        %v238 = vunpack.c.l.b16 %v225
        %v239 = vunpack.c.l.b16 %v226
        %v240 = vpack.c.b16 %v239, %v238
        %v250 = vunpack.c.l.b16 %v227
        %v251 = vunpack.c.h.b16 %v227
        %v252 = vunpack.c.l.b16 %v228
        %v253 = vunpack.c.h.b16 %v228
        %v254 = vunpack.c.l.b16 %v229
        %v255 = vunpack.c.h.b16 %v229
        %v256 = vunpack.c.l.b16 %v230
        %v257 = vunpack.c.h.b16 %v230
        %v258 = vunpack.c.l.b16 %v231
        %v259 = vunpack.c.h.b16 %v231
        %v260 = vunpack.c.l.b16 %v232
        %v261 = vunpack.c.h.b16 %v232
        %v262 = vunpack.c.l.b16 %v233
        %v263 = vunpack.c.h.b16 %v233
        %v264 = vunpack.c.l.b16 %v234
        %v265 = vunpack.c.h.b16 %v234
        %v266 = vunpack.c.l.b16 %v235
        %v267 = vunpack.c.h.b16 %v235
        %v268 = vpack.c.b16 %v252, %v250
        %v269 = vpack.c.b16 %v253, %v251
        %v270 = vpack.c.b16 %v256, %v254
        %v271 = vpack.c.b16 %v257, %v255
        %v272 = vpack.c.b16 %v260, %v258
        %v273 = vpack.c.b16 %v261, %v259
        %v274 = vpack.c.b16 %v264, %v262
        %v275 = vpack.c.b16 %v265, %v263
        %v276 = vpack.c.b16 %v266, %v266
        %v277 = vpack.c.b16 %v267, %v267
        %vm286 = vcmask 588800
        %v288 = vsel %vm286, %v240, 0
        %vm290 = vcmask 1043456
        %v292 = vsel %vm290, %v276, 0
        %v295 = vsel %vm290, %v277, 0
        %297 = vmatpush.bf16.msra.mxu0 0
        %298 = vmatpush.bf16.msra.mxu0 0
        %299 = vmatpush.bf16.msra.mxu0 0
        %300 = vmatpush.bf16.msra.mxu0 %v292
        %301 = vmatpush.bf16.msra.mxu0 %v274
        %302 = vmatpush.bf16.msra.mxu0 %v272
        %303 = vmatpush.bf16.msra.mxu0 %v270
        %304 = vmatpush.bf16.msra.mxu0 %v268
        %305 = vmatmul.bf16.gmra.mxu0 %v288
        %v306 = vpop.f32.mrf.mxu0
        %v307 = vadd.f32 0.0, %v306
        %v308 = vpop.f32.mrf.mxu0
        %v309 = vadd.f32 0.0, %v308
        %310 = vdwg.mxu0
        %311 = vmatpush.bf16.msra.mxu0 0
        %312 = vmatpush.bf16.msra.mxu0 0
        %313 = vmatpush.bf16.msra.mxu0 0
        %314 = vmatpush.bf16.msra.mxu0 %v295
        %315 = vmatpush.bf16.msra.mxu0 %v275
        %316 = vmatpush.bf16.msra.mxu0 %v273
        %317 = vmatpush.bf16.msra.mxu0 %v271
        %318 = vmatpush.bf16.msra.mxu0 %v269
        %319 = vmatmul.bf16.gmra.mxu0 %v288
        %v320 = vpop.f32.mrf.mxu0
        %v321 = vadd.f32 0.0, %v320
        %v322 = vpop.f32.mrf.mxu0
        %v323 = vadd.f32 0.0, %v322
        %324 = vdwg.mxu0
        %v325 = vadd.f32 %v307, %v321
        %326 = vadd.xlane.f32.xlu0 %v325
        %v327 = vpop.xlane.xlu0 %326
        %v328 = vadd.f32 %v309, %v323
        %329 = vadd.xlane.f32.xlu0 %v328
        %v330 = vpop.xlane.xlu0 %329
        %vm331 = vcmask 7168
        %332 = vst.msk [vmem:[%s218] sm:$0xff] %vm331, %v327
        %333 = vst.msk [vmem:[%s218 + $0x8] sm:$0xff] %vm331, %v330
        %v334 = vmul.f32 %v307, %v307
        %v335 = vmul.f32 %v321, %v321
        %v336 = vmul.f32 %v309, %v309
        %v337 = vmul.f32 %v323, %v323
        %v338 = vadd.f32 %v334, %v335
        %339 = vadd.xlane.f32.xlu0 %v338
        %v340 = vpop.xlane.xlu0 %339
        %v341 = vadd.f32 %v336, %v337
        %342 = vadd.xlane.f32.xlu0 %v341
        %v343 = vpop.xlane.xlu0 %342
        %344 = vst.msk [vmem:[%s223] sm:$0xff] %vm331, %v340
        %345 = vst.msk [vmem:[%s223 + $0x8] sm:$0xff] %vm331, %v343
        %p346 = scmp.lt.s32.totalorder %s19, 1
        %s347 = scalar_select %p346, %s19, 1
        %s348 = smul.addr %s347, 2
        %s349 = smul.addr %s348, 8
        %s350 = scalar_lea.vmem %s2, %s349
        %p351 = scmp.lt.s32.totalorder %s19, 1
        %s352 = scalar_select %p351, %s19, 1
        %s353 = smul.addr %s352, 2
        %s354 = smul.addr %s353, 8
        %s355 = scalar_lea.vmem %s3, %s354
        // Predicated region
        $region37: #{tpu_custom_call.1} parent=27 // pred_check
          %p356 = pneg %p84
        $region38: #{tpu_custom_call.1} parent=27 // pred_check_branch
          %358 = sbr.rel (%p356) target = $region40
        $region39: #{tpu_custom_call.1} parent=27 // pred_region
          _
        $region40: #{tpu_custom_call.1} parent=27 // pred_fallthru
          _
        // Predicated region
        $region41: #{tpu_custom_call.1} parent=27 // pred_check
          %p359 = pneg %p110
        $region42: #{tpu_custom_call.1} parent=27 // pred_check_branch
          %361 = sbr.rel (%p359) target = $region44
        $region43: #{tpu_custom_call.1} parent=27 // pred_region
          _
        $region44: #{tpu_custom_call.1} parent=27 // pred_fallthru
          _
      $region28: #{tpu_custom_call.1} parent=5 // pred_fallthru
        _
      %p362 = scmp.le.s32.totalorder 2, %s14
      // Predicated region
      $region45: #{tpu_custom_call.1} parent=5 // pred_check
        %p363 = pneg %p362
      $region46: #{tpu_custom_call.1} parent=5 // pred_check_branch
        %365 = sbr.rel (%p363) target = $region48
      $region47: #{tpu_custom_call.1} parent=5 // pred_region
        %s366 = ssub.s32 %s14, 2
        // Predicated region
        $region49: #{tpu_custom_call.1} parent=47 // pred_check
          %p367 = pneg %p90
        $region50: #{tpu_custom_call.1} parent=47 // pred_check_branch
          %369 = sbr.rel (%p367) target = $region52
        $region51: #{tpu_custom_call.1} parent=47 // pred_region
          %p370 = scmp.lt.s32.totalorder %s20, 1
          %s371 = scalar_select %p370, %s20, 1
          %s372 = smul.addr %s371, 2
          %s373 = smul.addr %s372, 8
          %s374 = scalar_lea.vmem %s2, %s373
        $region52: #{tpu_custom_call.1} parent=47 // pred_fallthru
          _
        // Predicated region
        $region53: #{tpu_custom_call.1} parent=47 // pred_check
          %p375 = pneg %p116
        $region54: #{tpu_custom_call.1} parent=47 // pred_check_branch
          %377 = sbr.rel (%p375) target = $region56
        $region55: #{tpu_custom_call.1} parent=47 // pred_region
          %p378 = scmp.lt.s32.totalorder %s20, 1
          %s379 = scalar_select %p378, %s20, 1
          %s380 = smul.addr %s379, 2
          %s381 = smul.addr %s380, 8
          %s382 = scalar_lea.vmem %s3, %s381
        $region56: #{tpu_custom_call.1} parent=47 // pred_fallthru
          _
      $region48: #{tpu_custom_call.1} parent=5 // pred_fallthru
        _
    $region6: #{tpu_custom_call.1} parent=1 // loop_footer
      %s18 = sadd.s32 1, %s14
    $region7: #{tpu_custom_call.1} parent=1 // loop_footer_branch
      %13 = sbr.rel target = $region3
    $region8: #{tpu_custom_call.1} parent=1 // loop_exit
      _
    %383 = vsyncpa [#allocation3], 1
    %s384 = scalar_lea.sflag [#allocation3], 1
    %385 = vsyncpa %s384, 1
    %386 = vsyncpa [#allocation5], 1

</llo_original>
